<compile_context>
chip_gen: v7x
topology: tpu7x:2x2x1
jax: 0.10.0
libtpu: 0.0.40
codegen_flags: <defaults>
</compile_context>

<pallas_src>
import jax
import jax.numpy as jnp
from jax.experimental import pallas as pl
from jax.experimental.pallas import tpu as pltpu


def _formula_attn_kernel(x_ref, p_ref, out_ref):
    """Whole-batch FormulaAttn forward in one invocation.

    x_ref  : (B*R, CP)  row (b*R+r) = [enc_flat[b] (L*D) | formula[r] (H) | 1 | 0-pad]
    p_ref  : (CP + L*H + B*R, L*H) packed parameters:
               rows [0, CP)          : W_big  (block-diag-over-l attn weights + bias row)
               rows [CP, CP+L*H)     : S      (block-diag score weights, cols [0, L) used)
               rows [CP+L*H, ...)    : additive seq mask, expanded to (B*R, L)
    out_ref: (B*R, L) softmax attention weights (wrapper reshapes to (B, R, L) for free)
    """
    BR, CP = x_ref.shape
    L = out_ref.shape[-1]
    LH = p_ref.shape[-1]

    # --- One fused MXU pass: every pre-tanh energy, lane-dense (l,h)-minor. ---
    w_big = p_ref[0:CP, :]                                                 # (CP, L*H)
    feat = jnp.tanh(jnp.dot(x_ref[...], w_big,
                            preferred_element_type=jnp.float32))          # (B*R, L*H)

    # --- Score reduction on the MXU (block-diagonal score-weight matrix). ---
    s_mat = p_ref[CP:CP + LH, 0:L]                                         # (L*H, L)
    e = jnp.dot(feat, s_mat, preferred_element_type=jnp.float32)          # (B*R, L)

    # --- Additive sequence mask (0 / -1e12), already expanded over R. ---
    e = e + p_ref[CP + LH:CP + LH + BR, 0:L]                               # (B*R, L)

    # --- Softmax over L; divide via EUP approximate reciprocal. ---
    m = jnp.max(e, axis=-1, keepdims=True)
    p = jnp.exp(e - m)
    s = jnp.sum(p, axis=-1, keepdims=True)
    out_ref[...] = p * pl.reciprocal(s, approx=True)                       # single bulk store


def formula_attn_pallas(formula_score, encoder_outputs, seq_mask,
                        attn_w, attn_b, score_w, score_b,
                        input_size, hidden_size):
    L, B, D = encoder_outputs.shape
    R, H = formula_score.shape
    assert D == input_size and H == hidden_size
    del score_b  # softmax shift-invariance: constant logit offset is a no-op

    f32 = jnp.float32
    BR = B * R
    LD, LH = L * D, L * H
    C = LD + H + 1                       # [enc features | formula features | bias indicator]
    CP = ((C + 7) // 8) * 8              # pad contraction dim to a sublane multiple

    # Tiny wrapper-side transpose (XLA, ~free): (L, B, D) -> (B, L*D).
    enc_flat = jnp.transpose(encoder_outputs.astype(f32), (1, 0, 2)).reshape(B, LD)

    # Expanded LHS, one row per (b, r) pair (built wrapper-side; ~9 KB here).
    x = jnp.concatenate(
        [jnp.repeat(enc_flat, R, axis=0),                       # (B*R, L*D)  row b*R+r -> enc[b]
         jnp.tile(formula_score.astype(f32), (B, 1)),           # (B*R, H)    row b*R+r -> formula[r]
         jnp.ones((BR, 1), f32),                                # bias indicator column
         jnp.zeros((BR, CP - C), f32)], axis=1)                 # pad to CP cols

    # W_big: kron(I_L, W_enc^T) over the enc block, W_f^T and attn_b tiled over l.
    # (attn weight layout: first `input_size` columns act on the encoder features.)
    w_t = jnp.transpose(attn_w).astype(f32)                     # (D+H, H) = [W_enc^T ; W_f^T]
    w_enc_t, w_f_t = w_t[:D], w_t[D:]
    w_big = jnp.concatenate(
        [jnp.kron(jnp.eye(L, dtype=f32), w_enc_t),              # (L*D, L*H)
         jnp.tile(w_f_t, (1, L)),                               # (H,   L*H)
         jnp.tile(attn_b.reshape(1, H).astype(f32), (1, L)),    # (1,   L*H) bias row
         jnp.zeros((CP - C, LH), f32)], axis=0)                 # pad to CP rows

    # S[l*H + h, l'] = score_w[h] * (l == l'): per-position score reduce as one matmul.
    sw = score_w.reshape(-1).astype(f32)
    s_blk = (jnp.eye(L, dtype=f32)[:, None, :] * sw[None, :, None]).reshape(LH, L)
    s_pad = jnp.zeros((LH, LH), f32).at[:, :L].set(s_blk)

    # Additive mask (0 / -1e12), expanded over the R formulas (row order b*R + r).
    neg_mask = jnp.where(seq_mask.astype(bool), f32(-1e12), f32(0.0))      # (B, L)
    neg_mask = jnp.repeat(neg_mask, R, axis=0)                             # (B*R, L)
    mask_pad = jnp.zeros((BR, LH), f32).at[:, :L].set(neg_mask)

    # Packed parameter slab: one DMA instead of many small ones.
    params = jnp.concatenate([w_big, s_pad, mask_pad], axis=0)             # (CP+L*H+B*R, L*H)

    out = pl.pallas_call(
        _formula_attn_kernel,
        out_shape=jax.ShapeDtypeStruct((BR, L), f32),
        # No grid / no BlockSpecs: single invocation, full-array blocks in VMEM.
    )(x, params)
    return out.reshape(B, R, L)                                            # free view


def formula_attn_reference(formula_score, encoder_outputs, seq_mask,
                           attn_w, attn_b, score_w, score_b,
                           input_size, hidden_size):
    """Pure-JAX transcription of the PyTorch forward (for verification)."""
    L, B, D = encoder_outputs.shape
    R = formula_score.shape[0]
    enc1 = encoder_outputs.reshape(-1, D)                                   # (L*B, D)
    enc1 = jnp.broadcast_to(enc1[None], (R, L * B, D))
    f1 = jnp.broadcast_to(formula_score[:, None, :], (R, L * B, hidden_size))
    energy_in = jnp.concatenate([enc1, f1], axis=2).reshape(-1, input_size + hidden_size)
    feat = jnp.tanh(energy_in @ attn_w.T + attn_b)
    e = feat @ score_w + score_b                                            # (R*L*B,)
    e = jnp.transpose(e.reshape(R, L, B), (2, 0, 1))                        # (B, R, L)
    e = jnp.where(seq_mask[:, None, :], -1e12, e)
    return jax.nn.softmax(e, axis=-1)


if __name__ == "__main__":
    input_size = 32
    hidden_size = 32
    max_len = 8
    batch = 2
    r_num = 4

    key = jax.random.PRNGKey(0)
    k1, k2, k3, k4, k5, k6 = jax.random.split(key, 6)

    encoder_outputs = jax.random.normal(k1, (max_len, batch, input_size), jnp.float32)
    formula_score = jax.random.normal(k2, (r_num, hidden_size), jnp.float32)

    # Parameters (deterministic, synthetic -- shapes from the nn.Linear defs)
    attn_w = 0.1 * jax.random.normal(k3, (hidden_size, hidden_size + input_size), jnp.float32)
    attn_b = 0.1 * jax.random.normal(k4, (hidden_size,), jnp.float32)
    score_w = 0.1 * jax.random.normal(k5, (hidden_size,), jnp.float32)
    score_b = 0.1 * jax.random.normal(k6, (1,), jnp.float32)

    # seq_mask: True = padded position (masked out)
    lengths = jnp.array([max_len, max_len - 3], dtype=jnp.int32)            # (B,)
    seq_mask = jnp.arange(max_len)[None, :] >= lengths[:, None]             # (B, L) bool

    out = formula_attn_pallas(formula_score, encoder_outputs, seq_mask,
                              attn_w, attn_b, score_w, score_b,
                              input_size, hidden_size)
    out = jax.block_until_ready(out)

    ref = formula_attn_reference(formula_score, encoder_outputs, seq_mask,
                                 attn_w, attn_b, score_w, score_b,
                                 input_size, hidden_size)
    assert out.shape == (batch, r_num, max_len)

    # Loose direct check: covers masking/softmax/weight-split/bias-folding plus the
    # EUP approximate reciprocal used for the softmax normalization.
    assert jnp.allclose(out, ref, atol=5e-3, rtol=5e-3), "mismatch vs reference (loose)"
    # Tight check with the (approximate) normalization constant factored out:
    # everything except the reciprocal must match the reference closely.
    renorm = out / jnp.sum(out, axis=-1, keepdims=True)
    assert jnp.allclose(renorm, ref, atol=1e-4, rtol=1e-4), "mismatch vs reference (tight)"

    print("KERNEL_OK")
</pallas_src>

<mosaic_0001>
module attributes {stable_mosaic.version = 11 : i64} {
  func.func @_formula_attn_kernel(%arg0: memref<8x296xf32, #tpu.memory_space<vmem>>, %arg1: memref<560x256xf32, #tpu.memory_space<vmem>>, %arg2: memref<8x8xf32, #tpu.memory_space<vmem>>) attributes {dimension_semantics = [], scalar_prefetch = 0 : i64, scratch_operands = 0 : i64, tpu.core_type = #tpu.core_type<tc>} {
    %c0 = arith.constant 0 : index
    %c0_0 = arith.constant 0 : index
    %0 = vector.load %arg1[%c0, %c0_0] : memref<560x256xf32, #tpu.memory_space<vmem>>, vector<296x256xf32>
    %c0_1 = arith.constant 0 : index
    %c0_2 = arith.constant 0 : index
    %1 = vector.load %arg0[%c0_1, %c0_2] : memref<8x296xf32, #tpu.memory_space<vmem>>, vector<8x296xf32>
    %cst = arith.constant dense<0.000000e+00> : vector<8x256xf32>
    %2 = tpu.matmul %1, %0, %cst {dimension_numbers = #tpu.dot_dimension_numbers<[1], [0], [0], [1], [0, 0, 1, 1], [], []>} : vector<8x296xf32>, vector<296x256xf32>, vector<8x256xf32> -> vector<8x256xf32>
    %3 = math.tanh %2 : vector<8x256xf32>
    %c296 = arith.constant 296 : index
    %c0_3 = arith.constant 0 : index
    %4 = vector.load %arg1[%c296, %c0_3] : memref<560x256xf32, #tpu.memory_space<vmem>>, vector<256x8xf32>
    %cst_4 = arith.constant dense<0.000000e+00> : vector<8x8xf32>
    %5 = tpu.matmul %3, %4, %cst_4 {dimension_numbers = #tpu.dot_dimension_numbers<[1], [0], [0], [1], [0, 0, 1, 1], [], []>} : vector<8x256xf32>, vector<256x8xf32>, vector<8x8xf32> -> vector<8x8xf32>
    %c552 = arith.constant 552 : index
    %c0_5 = arith.constant 0 : index
    %6 = vector.load %arg1[%c552, %c0_5] : memref<560x256xf32, #tpu.memory_space<vmem>>, vector<8x8xf32>
    %7 = arith.addf %5, %6 : vector<8x8xf32>
    %cst_6 = arith.constant dense<0xFF800000> : vector<8xf32>
    %8 = vector.multi_reduction <maximumf>, %7, %cst_6 [1] : vector<8x8xf32> to vector<8xf32>
    %9 = vector.shape_cast %8 : vector<8xf32> to vector<8x1xf32>
    %10 = vector.broadcast %9 : vector<8x1xf32> to vector<8x8xf32>
    %11 = arith.subf %7, %10 : vector<8x8xf32>
    %12 = math.exp %11 : vector<8x8xf32>
    %cst_7 = arith.constant dense<0.000000e+00> : vector<8xf32>
    %13 = vector.multi_reduction <add>, %12, %cst_7 [1] : vector<8x8xf32> to vector<8xf32>
    %14 = vector.shape_cast %13 : vector<8xf32> to vector<8x1xf32>
    %15 = tpu.reciprocal %14 {approx = true} : vector<8x1xf32> -> vector<8x1xf32>
    %16 = vector.broadcast %15 : vector<8x1xf32> to vector<8x8xf32>
    %17 = arith.mulf %12, %16 : vector<8x8xf32>
    %c0_8 = arith.constant 0 : index
    %c0_9 = arith.constant 0 : index
    %18 = vector.load %arg2[%c0_8, %c0_9] : memref<8x8xf32, #tpu.memory_space<vmem>>, vector<8x8xf32>
    tpu.vector_store %arg2[%c0_8, %c0_9], %17 {strides = array<i32>} : memref<8x8xf32, #tpu.memory_space<vmem>>, vector<8x8xf32>,
    return
  }
}

</mosaic_0001>

<llo_original>
// kernel: tpu_custom_call.1
$region0: #{tpu_custom_call.1}
  #allocation0 [shape = 'u32[]', space=smem, size = 0x4, offset = 0x4, fixed_abs, tag = 'smem constant byte address 0x4 - core index']
  #allocation1 [shape = 'u32[144,128]{1,0:T(1,128)}', space=vmem, size = 0x12000, scoped, tag = 'internal scratch']
  %s0 = inlined_call_operand.hbm [shape: f32[8,296], index: 0, kind: input, shape index: {}]
  %s1 = inlined_call_operand.hbm [shape: f32[560,256], index: 1, kind: input, shape index: {}]
  %s2 = inlined_call_operand.hbm [shape: f32[8,8], index: 2, kind: output, shape index: {}]
  %s3 = sld [smem:[#allocation0]]
  $region26: #{tpu_custom_call.1} parent=0
    _
  %s5 = ssub.s32 1, %s3
  %s6 = scalar_select 0, %s5, %s3
  $region1: #{tpu_custom_call.1} parent=0
    #allocation2 [shape = 'u8[12288]{0}', space=vmem, size = 0x3000, scoped, tag = 'input window, operand 0, single buffered']
    #allocation3 [shape = 's32[1]{0}', space=sflag, size = 0x4, scoped, tag = 'scoped memory for tpu_custom_call.1']
    #allocation4 [shape = 's32[1]{0}', space=sflag, size = 0x4, scoped, tag = 'scoped memory for tpu_custom_call.1']
    #allocation5 [shape = 'u8[573440]{0}', space=vmem, size = 0x8c000, scoped, tag = 'input window, operand 1, single buffered']
    #allocation6 [shape = 's32[1]{0}', space=sflag, size = 0x4, scoped, tag = 'scoped memory for tpu_custom_call.1']
    #allocation7 [shape = 'u8[4096]{0}', space=vmem, size = 0x1000, scoped, tag = 'output window, operand 0, single buffered']
    %7 = vsyncpa [#allocation3], 0
    %8 = vsyncpa [#allocation6], 0
    %9 = vsyncpa [#allocation4], 0
    // Predicated region
    $region2: #{tpu_custom_call.1} parent=1 // pred_check
      _
    $region3: #{tpu_custom_call.1} parent=1 // pred_check_branch
      %11 = sbr.rel (0) target = $region5
    $region4: #{tpu_custom_call.1} parent=1 // pred_region
      %s13 = ssub.s32 384, 384
      %14 = vsyncadd [#allocation3], %s13
      %s16 = sshll.u32 [#allocation2], 4
      %s17 = int_to_ptr.vmem [resolvable:$true] %s16
      %19 = dma.hbm_to_vmem [thread:$0]  %s0, 384, %s17, [#allocation3]
    $region5: #{tpu_custom_call.1} parent=1 // pred_fallthru
      _
    // Predicated region
    $region6: #{tpu_custom_call.1} parent=1 // pred_check
      _
    $region7: #{tpu_custom_call.1} parent=1 // pred_check_branch
      %21 = sbr.rel (0) target = $region9
    $region8: #{tpu_custom_call.1} parent=1 // pred_region
      %s23 = ssub.s32 17920, 17920
      %24 = vsyncadd [#allocation6], %s23
      %s25 = sshll.u32 [#allocation5], 4
      %s26 = int_to_ptr.vmem [resolvable:$true] %s25
      %31 = dma.hbm_to_vmem [thread:$0]  %s1, 17920, %s26, [#allocation6], 256, 256, 16
    $region9: #{tpu_custom_call.1} parent=1 // pred_fallthru
      _
    // Predicated region
    $region10: #{tpu_custom_call.1} parent=1 // pred_check
      _
    $region11: #{tpu_custom_call.1} parent=1 // pred_check_branch
      %33 = sbr.rel (0) target = $region13
    $region12: #{tpu_custom_call.1} parent=1 // pred_region
      %34 = dma.done [#allocation3], 384
    $region13: #{tpu_custom_call.1} parent=1 // pred_fallthru
      _
    // Predicated region
    $region14: #{tpu_custom_call.1} parent=1 // pred_check
      _
    $region15: #{tpu_custom_call.1} parent=1 // pred_check_branch
      %36 = sbr.rel (0) target = $region17
    $region16: #{tpu_custom_call.1} parent=1 // pred_region
      %37 = dma.done [#allocation6], 17920
    $region17: #{tpu_custom_call.1} parent=1 // pred_fallthru
      _
    %v38 = vld [vmem:[#allocation5] sm:$0xff]
    %v39 = vld [vmem:[#allocation5 + $0x8] sm:$0xff]
    %v40 = vld [vmem:[#allocation5 + $0x10] sm:$0xff]
    %v41 = vld [vmem:[#allocation5 + $0x18] sm:$0xff]
    %v42 = vld [vmem:[#allocation5 + $0x20] sm:$0xff]
    %v43 = vld [vmem:[#allocation5 + $0x28] sm:$0xff]
    %v44 = vld [vmem:[#allocation5 + $0x30] sm:$0xff]
    %v45 = vld [vmem:[#allocation5 + $0x38] sm:$0xff]
    %v46 = vld [vmem:[#allocation5 + $0x40] sm:$0xff]
    %v47 = vld [vmem:[#allocation5 + $0x48] sm:$0xff]
    %v48 = vld [vmem:[#allocation5 + $0x50] sm:$0xff]
    %v49 = vld [vmem:[#allocation5 + $0x58] sm:$0xff]
    %v50 = vld [vmem:[#allocation5 + $0x60] sm:$0xff]
    %v51 = vld [vmem:[#allocation5 + $0x68] sm:$0xff]
    %v52 = vld [vmem:[#allocation5 + $0x70] sm:$0xff]
    %v53 = vld [vmem:[#allocation5 + $0x78] sm:$0xff]
    %v54 = vld [vmem:[#allocation5 + $0x80] sm:$0xff]
    %v55 = vld [vmem:[#allocation5 + $0x88] sm:$0xff]
    %v56 = vld [vmem:[#allocation5 + $0x90] sm:$0xff]
    %v57 = vld [vmem:[#allocation5 + $0x98] sm:$0xff]
    %v58 = vld [vmem:[#allocation5 + $0xa0] sm:$0xff]
    %v59 = vld [vmem:[#allocation5 + $0xa8] sm:$0xff]
    %v60 = vld [vmem:[#allocation5 + $0xb0] sm:$0xff]
    %v61 = vld [vmem:[#allocation5 + $0xb8] sm:$0xff]
    %v62 = vld [vmem:[#allocation5 + $0xc0] sm:$0xff]
    %v63 = vld [vmem:[#allocation5 + $0xc8] sm:$0xff]
    %v64 = vld [vmem:[#allocation5 + $0xd0] sm:$0xff]
    %v65 = vld [vmem:[#allocation5 + $0xd8] sm:$0xff]
    %v66 = vld [vmem:[#allocation5 + $0xe0] sm:$0xff]
    %v67 = vld [vmem:[#allocation5 + $0xe8] sm:$0xff]
    %v68 = vld [vmem:[#allocation5 + $0xf0] sm:$0xff]
    %v69 = vld [vmem:[#allocation5 + $0xf8] sm:$0xff]
    %v70 = vld [vmem:[#allocation5 + $0x100] sm:$0xff]
    %v71 = vld [vmem:[#allocation5 + $0x108] sm:$0xff]
    %v72 = vld [vmem:[#allocation5 + $0x110] sm:$0xff]
    %v73 = vld [vmem:[#allocation5 + $0x118] sm:$0xff]
    %v74 = vld [vmem:[#allocation5 + $0x120] sm:$0xff]
    %v75 = vld [vmem:[#allocation5 + $0x128] sm:$0xff]
    %v76 = vld [vmem:[#allocation5 + $0x130] sm:$0xff]
    %v77 = vld [vmem:[#allocation5 + $0x138] sm:$0xff]
    %v78 = vld [vmem:[#allocation5 + $0x140] sm:$0xff]
    %v79 = vld [vmem:[#allocation5 + $0x148] sm:$0xff]
    %v80 = vld [vmem:[#allocation5 + $0x150] sm:$0xff]
    %v81 = vld [vmem:[#allocation5 + $0x158] sm:$0xff]
    %v82 = vld [vmem:[#allocation5 + $0x160] sm:$0xff]
    %v83 = vld [vmem:[#allocation5 + $0x168] sm:$0xff]
    %v84 = vld [vmem:[#allocation5 + $0x170] sm:$0xff]
    %v85 = vld [vmem:[#allocation5 + $0x178] sm:$0xff]
    %v86 = vld [vmem:[#allocation5 + $0x180] sm:$0xff]
    %v87 = vld [vmem:[#allocation5 + $0x188] sm:$0xff]
    %v88 = vld [vmem:[#allocation5 + $0x190] sm:$0xff]
    %v89 = vld [vmem:[#allocation5 + $0x198] sm:$0xff]
    %v90 = vld [vmem:[#allocation5 + $0x1a0] sm:$0xff]
    %v91 = vld [vmem:[#allocation5 + $0x1a8] sm:$0xff]
    %v92 = vld [vmem:[#allocation5 + $0x1b0] sm:$0xff]
    %v93 = vld [vmem:[#allocation5 + $0x1b8] sm:$0xff]
    %v94 = vld [vmem:[#allocation5 + $0x1c0] sm:$0xff]
    %v95 = vld [vmem:[#allocation5 + $0x1c8] sm:$0xff]
    %v96 = vld [vmem:[#allocation5 + $0x1d0] sm:$0xff]
    %v97 = vld [vmem:[#allocation5 + $0x1d8] sm:$0xff]
    %v98 = vld [vmem:[#allocation5 + $0x1e0] sm:$0xff]
    %v99 = vld [vmem:[#allocation5 + $0x1e8] sm:$0xff]
    %v100 = vld [vmem:[#allocation5 + $0x1f0] sm:$0xff]
    %v101 = vld [vmem:[#allocation5 + $0x1f8] sm:$0xff]
    %v102 = vld [vmem:[#allocation5 + $0x200] sm:$0xff]
    %v103 = vld [vmem:[#allocation5 + $0x208] sm:$0xff]
    %v104 = vld [vmem:[#allocation5 + $0x210] sm:$0xff]
    %v105 = vld [vmem:[#allocation5 + $0x218] sm:$0xff]
    %v106 = vld [vmem:[#allocation5 + $0x220] sm:$0xff]
    %v107 = vld [vmem:[#allocation5 + $0x228] sm:$0xff]
    %v108 = vld [vmem:[#allocation5 + $0x230] sm:$0xff]
    %v109 = vld [vmem:[#allocation5 + $0x238] sm:$0xff]
    %v110 = vld [vmem:[#allocation5 + $0x240] sm:$0xff]
    %v111 = vld [vmem:[#allocation5 + $0x248] sm:$0xff]
    %v112 = vld [vmem:[#allocation2] sm:$0xff]
    %v113 = vld [vmem:[#allocation2 + $0x8] sm:$0xff]
    %v114 = vld [vmem:[#allocation2 + $0x10] sm:$0xff]
    %vm115 = vcmask 326656
    %v117 = vsel %vm115, %v114, 0
    %119 = vmatprep.subr.mxu0 %v39
    %120 = vmatpush1.msra.mxu0 %v38
    %121 = vmatprep.subr.mxu0 %v41
    %122 = vmatpush1.msra.mxu0 %v40
    %123 = vmatprep.subr.mxu0 %v43
    %124 = vmatpush1.msra.mxu0 %v42
    %125 = vmatprep.subr.mxu0 %v45
    %126 = vmatpush1.msra.mxu0 %v44
    %127 = vmatprep.subr.mxu0 %v47
    %128 = vmatpush1.msra.mxu0 %v46
    %129 = vmatprep.subr.mxu0 %v49
    %130 = vmatpush1.msra.mxu0 %v48
    %131 = vmatprep.subr.mxu0 %v51
    %132 = vmatpush1.msra.mxu0 %v50
    %133 = vmatprep.subr.mxu0 %v53
    %134 = vmatpush1.msra.mxu0 %v52
    %135 = vmatprep.subr.mxu0 %v55
    %136 = vmatpush1.msra.mxu0 %v54
    %137 = vmatprep.subr.mxu0 %v57
    %138 = vmatpush1.msra.mxu0 %v56
    %139 = vmatprep.subr.mxu0 %v59
    %140 = vmatpush1.msra.mxu0 %v58
    %141 = vmatprep.subr.mxu0 %v61
    %142 = vmatpush1.msra.mxu0 %v60
    %143 = vmatprep.subr.mxu0 %v63
    %144 = vmatpush1.msra.mxu0 %v62
    %145 = vmatprep.subr.mxu0 %v65
    %146 = vmatpush1.msra.mxu0 %v64
    %147 = vmatprep.subr.mxu0 %v67
    %148 = vmatpush1.msra.mxu0 %v66
    %149 = vmatprep.subr.mxu0 %v69
    %150 = vmatpush1.msra.mxu0 %v68
    %151 = vmatprep.subr.mxu0 %v71
    %152 = vmatpush1.msra.mxu0 %v70
    %153 = vmatprep.subr.mxu0 %v73
    %154 = vmatpush1.msra.mxu0 %v72
    %155 = vmatprep.subr.mxu0 %v75
    %156 = vmatpush1.msra.mxu0 %v74
    %157 = vmatprep.subr.mxu0 %v77
    %158 = vmatpush1.msra.mxu0 %v76
    %159 = vmatprep.subr.mxu0 %v79
    %160 = vmatpush1.msra.mxu0 %v78
    %161 = vmatprep.subr.mxu0 %v81
    %162 = vmatpush1.msra.mxu0 %v80
    %163 = vmatprep.subr.mxu0 %v83
    %164 = vmatpush1.msra.mxu0 %v82
    %165 = vmatprep.subr.mxu0 %v85
    %166 = vmatpush1.msra.mxu0 %v84
    %167 = vmatprep.subr.mxu0 %v87
    %168 = vmatpush1.msra.mxu0 %v86
    %169 = vmatprep.subr.mxu0 %v89
    %170 = vmatpush1.msra.mxu0 %v88
    %171 = vmatprep.subr.mxu0 %v91
    %172 = vmatpush1.msra.mxu0 %v90
    %173 = vmatprep.subr.mxu0 %v93
    %174 = vmatpush1.msra.mxu0 %v92
    %175 = vmatprep.subr.mxu0 %v95
    %176 = vmatpush1.msra.mxu0 %v94
    %177 = vmatprep.subr.mxu0 %v97
    %178 = vmatpush1.msra.mxu0 %v96
    %179 = vmatprep.subr.mxu0 %v99
    %180 = vmatpush1.msra.mxu0 %v98
    %181 = vmatprep.subr.mxu0 %v101
    %182 = vmatpush1.msra.mxu0 %v100
    %183 = vmatprep.mubr.f32.mxu0 %v113
    %184 = vmatmul.mubr.f32.gmra.mrb[0].mxu0 %v112
    %v185 = vpop.f32.mrb[0].mxu0
    %v186 = vadd.f32 0.0, %v185
    %v187 = vpop.f32.mrb[0].mxu0
    %v188 = vadd.f32 0.0, %v187
    %189 = vdwg.mxu0
    %190 = vmatprep.subr.mxu0 %v103
    %191 = vmatpush1.msra.mxu0 %v102
    %192 = vmatprep.subr.mxu0 %v105
    %193 = vmatpush1.msra.mxu0 %v104
    %194 = vmatprep.subr.mxu0 %v107
    %195 = vmatpush1.msra.mxu0 %v106
    %196 = vmatprep.subr.mxu0 %v109
    %197 = vmatpush1.msra.mxu0 %v108
    %198 = vmatprep.subr.mxu0 %v111
    %199 = vmatpush1.msra.mxu0 %v110
    %200 = vmatprep.subr.mxu0 0.0
    %201 = vmatpush1.msra.mxu0 0.0
    %202 = vmatprep.subr.mxu0 0.0
    %203 = vmatpush1.msra.mxu0 0.0
    %204 = vmatprep.subr.mxu0 0.0
    %205 = vmatpush1.msra.mxu0 0.0
    %206 = vmatprep.subr.mxu0 0.0
    %207 = vmatpush1.msra.mxu0 0.0
    %208 = vmatprep.subr.mxu0 0.0
    %209 = vmatpush1.msra.mxu0 0.0
    %210 = vmatprep.subr.mxu0 0.0
    %211 = vmatpush1.msra.mxu0 0.0
    %212 = vmatprep.subr.mxu0 0.0
    %213 = vmatpush1.msra.mxu0 0.0
    %214 = vmatprep.subr.mxu0 0.0
    %215 = vmatpush1.msra.mxu0 0.0
    %216 = vmatprep.subr.mxu0 0.0
    %217 = vmatpush1.msra.mxu0 0.0
    %218 = vmatprep.subr.mxu0 0.0
    %219 = vmatpush1.msra.mxu0 0.0
    %220 = vmatprep.subr.mxu0 0.0
    %221 = vmatpush1.msra.mxu0 0.0
    %222 = vmatprep.subr.mxu0 0.0
    %223 = vmatpush1.msra.mxu0 0.0
    %224 = vmatprep.subr.mxu0 0.0
    %225 = vmatpush1.msra.mxu0 0.0
    %226 = vmatprep.subr.mxu0 0.0
    %227 = vmatpush1.msra.mxu0 0.0
    %228 = vmatprep.subr.mxu0 0.0
    %229 = vmatpush1.msra.mxu0 0.0
    %230 = vmatprep.subr.mxu0 0.0
    %231 = vmatpush1.msra.mxu0 0.0
    %232 = vmatprep.subr.mxu0 0.0
    %233 = vmatpush1.msra.mxu0 0.0
    %234 = vmatprep.subr.mxu0 0.0
    %235 = vmatpush1.msra.mxu0 0.0
    %236 = vmatprep.subr.mxu0 0.0
    %237 = vmatpush1.msra.mxu0 0.0
    %238 = vmatprep.subr.mxu0 0.0
    %239 = vmatpush1.msra.mxu0 0.0
    %240 = vmatprep.subr.mxu0 0.0
    %241 = vmatpush1.msra.mxu0 0.0
    %242 = vmatprep.subr.mxu0 0.0
    %243 = vmatpush1.msra.mxu0 0.0
    %244 = vmatprep.subr.mxu0 0.0
    %245 = vmatpush1.msra.mxu0 0.0
    %246 = vmatprep.subr.mxu0 0.0
    %247 = vmatpush1.msra.mxu0 0.0
    %248 = vmatprep.subr.mxu0 0.0
    %249 = vmatpush1.msra.mxu0 0.0
    %250 = vmatprep.subr.mxu0 0.0
    %251 = vmatpush1.msra.mxu0 0.0
    %252 = vmatprep.subr.mxu0 0.0
    %253 = vmatpush1.msra.mxu0 0.0
    %254 = vmatprep.mubr.f32.mxu0 0.0
    %255 = vmatmul.mubr.f32.gmra.mrb[0].mxu0 %v117
    %v256 = vpop.f32.mrb[0].mxu0
    %v257 = vadd.f32 %v186, %v256
    %v258 = vpop.f32.mrb[0].mxu0
    %v259 = vadd.f32 %v188, %v258
    %260 = vdwg.mxu0
    %v261 = vtanh.pop %v257
    %v262 = vtanh.pop %v259
    %v263 = vld [vmem:[#allocation5 + $0x250] sm:$0xff]
    %v264 = vld [vmem:[#allocation5 + $0x260] sm:$0xff]
    %v265 = vld [vmem:[#allocation5 + $0x270] sm:$0xff]
    %v266 = vld [vmem:[#allocation5 + $0x280] sm:$0xff]
    %v267 = vld [vmem:[#allocation5 + $0x290] sm:$0xff]
    %v268 = vld [vmem:[#allocation5 + $0x2a0] sm:$0xff]
    %v269 = vld [vmem:[#allocation5 + $0x2b0] sm:$0xff]
    %v270 = vld [vmem:[#allocation5 + $0x2c0] sm:$0xff]
    %v271 = vld [vmem:[#allocation5 + $0x2d0] sm:$0xff]
    %v272 = vld [vmem:[#allocation5 + $0x2e0] sm:$0xff]
    %v273 = vld [vmem:[#allocation5 + $0x2f0] sm:$0xff]
    %v274 = vld [vmem:[#allocation5 + $0x300] sm:$0xff]
    %v275 = vld [vmem:[#allocation5 + $0x310] sm:$0xff]
    %v276 = vld [vmem:[#allocation5 + $0x320] sm:$0xff]
    %v277 = vld [vmem:[#allocation5 + $0x330] sm:$0xff]
    %v278 = vld [vmem:[#allocation5 + $0x340] sm:$0xff]
    %v279 = vld [vmem:[#allocation5 + $0x350] sm:$0xff]
    %v280 = vld [vmem:[#allocation5 + $0x360] sm:$0xff]
    %v281 = vld [vmem:[#allocation5 + $0x370] sm:$0xff]
    %v282 = vld [vmem:[#allocation5 + $0x380] sm:$0xff]
    %v283 = vld [vmem:[#allocation5 + $0x390] sm:$0xff]
    %v284 = vld [vmem:[#allocation5 + $0x3a0] sm:$0xff]
    %v285 = vld [vmem:[#allocation5 + $0x3b0] sm:$0xff]
    %v286 = vld [vmem:[#allocation5 + $0x3c0] sm:$0xff]
    %v287 = vld [vmem:[#allocation5 + $0x3d0] sm:$0xff]
    %v288 = vld [vmem:[#allocation5 + $0x3e0] sm:$0xff]
    %v289 = vld [vmem:[#allocation5 + $0x3f0] sm:$0xff]
    %v290 = vld [vmem:[#allocation5 + $0x400] sm:$0xff]
    %v291 = vld [vmem:[#allocation5 + $0x410] sm:$0xff]
    %v292 = vld [vmem:[#allocation5 + $0x420] sm:$0xff]
    %v293 = vld [vmem:[#allocation5 + $0x430] sm:$0xff]
    %v294 = vld [vmem:[#allocation5 + $0x440] sm:$0xff]
    %v295 = vld [vmem:[#allocation5 + $0x450] sm:$0xff]
    %296 = vmatprep.subr.mxu0 0.0
    %297 = vmatpush1.msra.mxu0 %v263
    %298 = vmatprep.subr.mxu0 0.0
    %299 = vmatpush1.msra.mxu0 %v264
    %300 = vmatprep.subr.mxu0 0.0
    %301 = vmatpush1.msra.mxu0 %v265
    %302 = vmatprep.subr.mxu0 0.0
    %303 = vmatpush1.msra.mxu0 %v266
    %304 = vmatprep.subr.mxu0 0.0
    %305 = vmatpush1.msra.mxu0 %v267
    %306 = vmatprep.subr.mxu0 0.0
    %307 = vmatpush1.msra.mxu0 %v268
    %308 = vmatprep.subr.mxu0 0.0
    %309 = vmatpush1.msra.mxu0 %v269
    %310 = vmatprep.subr.mxu0 0.0
    %311 = vmatpush1.msra.mxu0 %v270
    %312 = vmatprep.subr.mxu0 0.0
    %313 = vmatpush1.msra.mxu0 %v271
    %314 = vmatprep.subr.mxu0 0.0
    %315 = vmatpush1.msra.mxu0 %v272
    %316 = vmatprep.subr.mxu0 0.0
    %317 = vmatpush1.msra.mxu0 %v273
    %318 = vmatprep.subr.mxu0 0.0
    %319 = vmatpush1.msra.mxu0 %v274
    %320 = vmatprep.subr.mxu0 0.0
    %321 = vmatpush1.msra.mxu0 %v275
    %322 = vmatprep.subr.mxu0 0.0
    %323 = vmatpush1.msra.mxu0 %v276
    %324 = vmatprep.subr.mxu0 0.0
    %325 = vmatpush1.msra.mxu0 %v277
    %326 = vmatprep.subr.mxu0 0.0
    %327 = vmatpush1.msra.mxu0 %v278
    %328 = vmatprep.subr.mxu0 0.0
    %329 = vmatpush1.msra.mxu0 %v279
    %330 = vmatprep.subr.mxu0 0.0
    %331 = vmatpush1.msra.mxu0 %v280
    %332 = vmatprep.subr.mxu0 0.0
    %333 = vmatpush1.msra.mxu0 %v281
    %334 = vmatprep.subr.mxu0 0.0
    %335 = vmatpush1.msra.mxu0 %v282
    %336 = vmatprep.subr.mxu0 0.0
    %337 = vmatpush1.msra.mxu0 %v283
    %338 = vmatprep.subr.mxu0 0.0
    %339 = vmatpush1.msra.mxu0 %v284
    %340 = vmatprep.subr.mxu0 0.0
    %341 = vmatpush1.msra.mxu0 %v285
    %342 = vmatprep.subr.mxu0 0.0
    %343 = vmatpush1.msra.mxu0 %v286
    %344 = vmatprep.subr.mxu0 0.0
    %345 = vmatpush1.msra.mxu0 %v287
    %346 = vmatprep.subr.mxu0 0.0
    %347 = vmatpush1.msra.mxu0 %v288
    %348 = vmatprep.subr.mxu0 0.0
    %349 = vmatpush1.msra.mxu0 %v289
    %350 = vmatprep.subr.mxu0 0.0
    %351 = vmatpush1.msra.mxu0 %v290
    %352 = vmatprep.subr.mxu0 0.0
    %353 = vmatpush1.msra.mxu0 %v291
    %354 = vmatprep.subr.mxu0 0.0
    %355 = vmatpush1.msra.mxu0 %v292
    %356 = vmatprep.subr.mxu0 0.0
    %357 = vmatpush1.msra.mxu0 %v293
    %358 = vmatprep.subr.mxu0 0.0
    %359 = vmatpush1.msra.mxu0 %v294
    %360 = vmatprep.mubr.f32.mxu0 %v262
    %361 = vmatmul.mubr.f32.gmra.mrb[0].mxu0 %v261
    %v362 = vpop.f32.mrb[0].mxu0
    %v363 = vadd.f32 %v295, %v362
    %v364 = vpop.f32.mrb[0].mxu0
    %365 = vdwg.mxu0
    %vm366 = vcmask 64512
    %v367 = vsel %vm366, %v363, -inf
    %368 = vmax.xlane.f32.xlu0 %v367
    %v369 = vpop.xlane.xlu0 %368
    %v370 = vsub.f32 %v363, %v369
    %v371 = vmul.f32 %v370, 1.442695
    %v372 = vpow.pop %v371
    %v373 = vsel %vm366, %v372, 0.0
    %374 = vadd.xlane.f32.xlu0 %v373
    %v375 = vpop.xlane.xlu0 %374
    %v376 = vrcp.pop %v375
    %v377 = vmul.f32 %v372, %v376
    %378 = vst.msk [vmem:[#allocation7] sm:$0xff] %vm366, %v377
    // Predicated region
    $region18: #{tpu_custom_call.1} parent=1 // pred_check
      _
    $region19: #{tpu_custom_call.1} parent=1 // pred_check_branch
      %380 = sbr.rel (0) target = $region21
    $region20: #{tpu_custom_call.1} parent=1 // pred_region
      %s382 = ssub.s32 128, 128
      %383 = vsyncadd [#allocation4], %s382
      %s385 = sshll.u32 [#allocation7], 4
      %s386 = int_to_ptr.vmem [resolvable:$true] %s385
      %388 = dma.vmem_to_hbm [thread:$0]  %s386, 128, %s2, [#allocation4]
    $region21: #{tpu_custom_call.1} parent=1 // pred_fallthru
      _
    // Predicated region
    $region22: #{tpu_custom_call.1} parent=1 // pred_check
      _
    $region23: #{tpu_custom_call.1} parent=1 // pred_check_branch
      %390 = sbr.rel (0) target = $region25
    $region24: #{tpu_custom_call.1} parent=1 // pred_region
      %391 = dma.done [#allocation4], 128
    $region25: #{tpu_custom_call.1} parent=1 // pred_fallthru
      _
    %392 = vsyncpa [#allocation3], 1
    %393 = vsyncpa [#allocation6], 1
    %394 = vsyncpa [#allocation4], 1

</llo_original>
